<compile_context>
chip_gen: v5e
topology: v5e:2x2
jax: 0.10.0
libtpu: 0.0.40
codegen_flags: <defaults>
</compile_context>

<pallas_src>
import functools

import jax
import jax.numpy as jnp
from jax.experimental import pallas as pl
from jax.experimental.pallas import tpu as pltpu

INPUT_DIM = 54
HIDDEN_DIM = 128
OUTPUT_DIM = 18          # len(ALL_MOVES)
PAD_IN = 64              # INPUT_DIM padded up to a multiple of 8 (sublanes)
PAD_OUT = 128            # OUTPUT_DIM padded up to a full lane width
MAX_TB = 512             # batch tile (rows per grid step); fits VMEM on all gens


def _round_up(n, m):
    return ((n + m - 1) // m) * m


def _mlp_kernel(x_ref, w1_ref, b1_ref, w2_ref, b2_ref, w3_ref, b3_ref, o_ref):
    # x tile: [TB, PAD_IN] bf16; weights bf16; biases f32; output f32.
    x = x_ref[...]

    h1 = jnp.dot(x, w1_ref[...], preferred_element_type=jnp.float32) + b1_ref[...]
    h1 = jnp.maximum(h1, 0.0).astype(jnp.bfloat16)        # ReLU in f32, cast for MXU

    h2 = jnp.dot(h1, w2_ref[...], preferred_element_type=jnp.float32) + b2_ref[...]
    h2 = jnp.maximum(h2, 0.0).astype(jnp.bfloat16)

    o_ref[...] = (
        jnp.dot(h2, w3_ref[...], preferred_element_type=jnp.float32) + b3_ref[...]
    )


@functools.partial(jax.jit, static_argnames=())
def imitation_model_forward(x, params):
    """Pallas forward pass of ImitationModel.

    x: [B, INPUT_DIM] (any numeric dtype; cast like PyTorch x.float())
    params: dict with w1 [54,128], b1 [1,128], w2 [128,128], b2 [1,128],
            w3 [128,18], b3 [1,18] (all float32).
    returns: [B, OUTPUT_DIM] float32 logits
    """
    B = x.shape[0]

    # --- batch tiling / padding ---------------------------------------------
    tb = min(MAX_TB, _round_up(B, 8))
    b_pad = _round_up(B, tb)
    n_tiles = b_pad // tb

    # --- operand preparation (lane / sublane alignment + bf16 inputs) --------
    x_f32 = x.astype(jnp.float32)
    x_p = jnp.zeros((b_pad, PAD_IN), jnp.float32).at[:B, :INPUT_DIM].set(x_f32)
    x_p = x_p.astype(jnp.bfloat16)

    w1 = jnp.zeros((PAD_IN, HIDDEN_DIM), jnp.float32).at[:INPUT_DIM, :].set(
        params["w1"]).astype(jnp.bfloat16)
    w2 = params["w2"].astype(jnp.bfloat16)
    w3 = jnp.zeros((HIDDEN_DIM, PAD_OUT), jnp.float32).at[:, :OUTPUT_DIM].set(
        params["w3"]).astype(jnp.bfloat16)

    b1 = params["b1"].astype(jnp.float32)
    b2 = params["b2"].astype(jnp.float32)
    b3 = jnp.zeros((1, PAD_OUT), jnp.float32).at[:, :OUTPUT_DIM].set(
        params["b3"].astype(jnp.float32))

    # --- cost hint for the XLA scheduler --------------------------------------
    flops = 2 * b_pad * (PAD_IN * HIDDEN_DIM
                         + HIDDEN_DIM * HIDDEN_DIM
                         + HIDDEN_DIM * PAD_OUT)
    bytes_accessed = (x_p.size * 2 + b_pad * PAD_OUT * 4
                      + (w1.size + w2.size + w3.size) * 2
                      + (b1.size + b2.size + b3.size) * 4)
    cost = pl.CostEstimate(flops=flops, transcendentals=0,
                           bytes_accessed=bytes_accessed)

    resident = lambda i: (0, 0)   # weights/biases: same block every grid step

    out_pad = pl.pallas_call(
        _mlp_kernel,
        out_shape=jax.ShapeDtypeStruct((b_pad, PAD_OUT), jnp.float32),
        grid=(n_tiles,),
        in_specs=[
            pl.BlockSpec((tb, PAD_IN), lambda i: (i, 0)),        # x tile
            pl.BlockSpec((PAD_IN, HIDDEN_DIM), resident),        # w1
            pl.BlockSpec((1, HIDDEN_DIM), resident),             # b1
            pl.BlockSpec((HIDDEN_DIM, HIDDEN_DIM), resident),    # w2
            pl.BlockSpec((1, HIDDEN_DIM), resident),             # b2
            pl.BlockSpec((HIDDEN_DIM, PAD_OUT), resident),       # w3 (padded)
            pl.BlockSpec((1, PAD_OUT), resident),                # b3 (padded)
        ],
        out_specs=pl.BlockSpec((tb, PAD_OUT), lambda i: (i, 0)),
        compiler_params=pltpu.CompilerParams(
            dimension_semantics=("parallel",),   # v7x: shard batch over 2 TCs
        ),
        cost_estimate=cost,
    )(x_p, w1, b1, w2, b2, w3, b3)

    # Strip batch padding and the lane-padding of the logits.
    return out_pad[:B, :OUTPUT_DIM]


def init_params(key):
    """Deterministic init mimicking nn.Linear's U(-1/sqrt(fan_in), 1/sqrt(fan_in))."""
    keys = jax.random.split(key, 6)

    def lin(kw, kb, fan_in, fan_out):
        bound = 1.0 / jnp.sqrt(jnp.float32(fan_in))
        w = jax.random.uniform(kw, (fan_in, fan_out), jnp.float32, -bound, bound)
        b = jax.random.uniform(kb, (1, fan_out), jnp.float32, -bound, bound)
        return w, b

    w1, b1 = lin(keys[0], keys[1], INPUT_DIM, HIDDEN_DIM)
    w2, b2 = lin(keys[2], keys[3], HIDDEN_DIM, HIDDEN_DIM)
    w3, b3 = lin(keys[4], keys[5], HIDDEN_DIM, OUTPUT_DIM)
    return {"w1": w1, "b1": b1, "w2": w2, "b2": b2, "w3": w3, "b3": b3}


if __name__ == "__main__":
    key = jax.random.PRNGKey(0)
    k_params, k_x = jax.random.split(key)

    params = init_params(k_params)
    # Cube state encoding (sticker ids) as ints; batch of 8.
    x = jax.random.randint(k_x, (8, INPUT_DIM), 0, 6).astype(jnp.float32)

    out = imitation_model_forward(x, params)
    out = jax.block_until_ready(out)
    assert out.shape == (8, OUTPUT_DIM)

    # Reference in plain JAX with bf16-matched math (same precision contract:
    # bf16 operands, f32 accumulation, f32 bias/ReLU).
    xb = x.astype(jnp.bfloat16)
    w1b = params["w1"].astype(jnp.bfloat16)
    w2b = params["w2"].astype(jnp.bfloat16)
    w3b = params["w3"].astype(jnp.bfloat16)
    h1 = jnp.maximum(
        jnp.dot(xb, w1b, preferred_element_type=jnp.float32) + params["b1"], 0.0)
    h2 = jnp.maximum(
        jnp.dot(h1.astype(jnp.bfloat16), w2b, preferred_element_type=jnp.float32)
        + params["b2"], 0.0)
    ref = (jnp.dot(h2.astype(jnp.bfloat16), w3b, preferred_element_type=jnp.float32)
           + params["b3"])
    assert jnp.allclose(out, ref, atol=2e-2, rtol=2e-2), (
        float(jnp.max(jnp.abs(out - ref))))

    # Also sanity-check against full-f32 math (loose tolerance for bf16 inputs).
    h1f = jnp.maximum(x @ params["w1"] + params["b1"], 0.0)
    h2f = jnp.maximum(h1f @ params["w2"] + params["b2"], 0.0)
    ref_f32 = h2f @ params["w3"] + params["b3"]
    assert jnp.allclose(out, ref_f32, atol=1e-1, rtol=1e-1)

    print("KERNEL_OK")
</pallas_src>

<mosaic_0001>
module attributes {stable_mosaic.version = 11 : i64} {
  func.func @_mlp_kernel(%arg0: i32, %arg1: memref<8x64xbf16, #tpu.memory_space<vmem>>, %arg2: memref<64x128xbf16, #tpu.memory_space<vmem>>, %arg3: memref<1x128xf32, #tpu.memory_space<vmem>>, %arg4: memref<128x128xbf16, #tpu.memory_space<vmem>>, %arg5: memref<1x128xf32, #tpu.memory_space<vmem>>, %arg6: memref<128x128xbf16, #tpu.memory_space<vmem>>, %arg7: memref<1x128xf32, #tpu.memory_space<vmem>>, %arg8: memref<8x128xf32, #tpu.memory_space<vmem>>) attributes {dimension_semantics = [#tpu.dimension_semantics<parallel>], iteration_bounds = array<i64: 1>, scalar_prefetch = 0 : i64, scratch_operands = 0 : i64, tpu.core_type = #tpu.core_type<tc>, window_params = [{transform_indices = @transform_0, window_bounds = array<i64: 8, 64>}, {pipeline_mode = #tpu.pipeline_mode<synchronous>, transform_indices = @transform_1, window_bounds = array<i64: 64, 128>}, {pipeline_mode = #tpu.pipeline_mode<synchronous>, transform_indices = @transform_2, window_bounds = array<i64: 1, 128>}, {pipeline_mode = #tpu.pipeline_mode<synchronous>, transform_indices = @transform_3, window_bounds = array<i64: 128, 128>}, {pipeline_mode = #tpu.pipeline_mode<synchronous>, transform_indices = @transform_4, window_bounds = array<i64: 1, 128>}, {pipeline_mode = #tpu.pipeline_mode<synchronous>, transform_indices = @transform_5, window_bounds = array<i64: 128, 128>}, {pipeline_mode = #tpu.pipeline_mode<synchronous>, transform_indices = @transform_6, window_bounds = array<i64: 1, 128>}, {transform_indices = @transform_7, window_bounds = array<i64: 8, 128>}]} {
    %c0 = arith.constant 0 : index
    %c0_0 = arith.constant 0 : index
    %0 = vector.load %arg1[%c0, %c0_0] : memref<8x64xbf16, #tpu.memory_space<vmem>>, vector<8x64xbf16>
    %c0_1 = arith.constant 0 : index
    %c0_2 = arith.constant 0 : index
    %1 = vector.load %arg2[%c0_1, %c0_2] : memref<64x128xbf16, #tpu.memory_space<vmem>>, vector<64x128xbf16>
    %cst = arith.constant dense<0.000000e+00> : vector<8x128xf32>
    %2 = tpu.matmul %0, %1, %cst {dimension_numbers = #tpu.dot_dimension_numbers<[1], [0], [0], [1], [0, 0, 1, 1], [], []>} : vector<8x64xbf16>, vector<64x128xbf16>, vector<8x128xf32> -> vector<8x128xf32>
    %c0_3 = arith.constant 0 : index
    %c0_4 = arith.constant 0 : index
    %3 = vector.load %arg3[%c0_3, %c0_4] : memref<1x128xf32, #tpu.memory_space<vmem>>, vector<1x128xf32>
    %4 = vector.broadcast %3 : vector<1x128xf32> to vector<8x128xf32>
    %5 = arith.addf %2, %4 : vector<8x128xf32>
    %cst_5 = arith.constant 0.000000e+00 : f32
    %6 = vector.broadcast %cst_5 : f32 to vector<8x128xf32>
    %7 = arith.maximumf %5, %6 : vector<8x128xf32>
    %8 = arith.truncf %7 : vector<8x128xf32> to vector<8x128xbf16>
    %c0_6 = arith.constant 0 : index
    %c0_7 = arith.constant 0 : index
    %9 = vector.load %arg4[%c0_6, %c0_7] : memref<128x128xbf16, #tpu.memory_space<vmem>>, vector<128x128xbf16>
    %cst_8 = arith.constant dense<0.000000e+00> : vector<8x128xf32>
    %10 = tpu.matmul %8, %9, %cst_8 {dimension_numbers = #tpu.dot_dimension_numbers<[1], [0], [0], [1], [0, 0, 1, 1], [], []>} : vector<8x128xbf16>, vector<128x128xbf16>, vector<8x128xf32> -> vector<8x128xf32>
    %c0_9 = arith.constant 0 : index
    %c0_10 = arith.constant 0 : index
    %11 = vector.load %arg5[%c0_9, %c0_10] : memref<1x128xf32, #tpu.memory_space<vmem>>, vector<1x128xf32>
    %12 = vector.broadcast %11 : vector<1x128xf32> to vector<8x128xf32>
    %13 = arith.addf %10, %12 : vector<8x128xf32>
    %cst_11 = arith.constant 0.000000e+00 : f32
    %14 = vector.broadcast %cst_11 : f32 to vector<8x128xf32>
    %15 = arith.maximumf %13, %14 : vector<8x128xf32>
    %16 = arith.truncf %15 : vector<8x128xf32> to vector<8x128xbf16>
    %c0_12 = arith.constant 0 : index
    %c0_13 = arith.constant 0 : index
    %17 = vector.load %arg6[%c0_12, %c0_13] : memref<128x128xbf16, #tpu.memory_space<vmem>>, vector<128x128xbf16>
    %cst_14 = arith.constant dense<0.000000e+00> : vector<8x128xf32>
    %18 = tpu.matmul %16, %17, %cst_14 {dimension_numbers = #tpu.dot_dimension_numbers<[1], [0], [0], [1], [0, 0, 1, 1], [], []>} : vector<8x128xbf16>, vector<128x128xbf16>, vector<8x128xf32> -> vector<8x128xf32>
    %c0_15 = arith.constant 0 : index
    %c0_16 = arith.constant 0 : index
    %19 = vector.load %arg7[%c0_15, %c0_16] : memref<1x128xf32, #tpu.memory_space<vmem>>, vector<1x128xf32>
    %20 = vector.broadcast %19 : vector<1x128xf32> to vector<8x128xf32>
    %21 = arith.addf %18, %20 : vector<8x128xf32>
    %c0_17 = arith.constant 0 : index
    %c0_18 = arith.constant 0 : index
    %22 = vector.load %arg8[%c0_17, %c0_18] : memref<8x128xf32, #tpu.memory_space<vmem>>, vector<8x128xf32>
    tpu.vector_store %arg8[%c0_17, %c0_18], %21 {strides = array<i32>} : memref<8x128xf32, #tpu.memory_space<vmem>>, vector<8x128xf32>,
    return
  }
  func.func @transform_0(%arg0: i32) -> (i32, i32) {
    %c0_i32 = arith.constant 0 : i32
    %c0_i32_0 = arith.constant 0 : i32
    return %arg0, %c0_i32 : i32, i32
  }
  func.func @transform_1(%arg0: i32) -> (i32, i32) {
    %c0_i32 = arith.constant 0 : i32
    %c0_i32_0 = arith.constant 0 : i32
    %c0_i32_1 = arith.constant 0 : i32
    return %c0_i32, %c0_i32_0 : i32, i32
  }
  func.func @transform_2(%arg0: i32) -> (i32, i32) {
    %c0_i32 = arith.constant 0 : i32
    %c0_i32_0 = arith.constant 0 : i32
    %c0_i32_1 = arith.constant 0 : i32
    return %c0_i32, %c0_i32_0 : i32, i32
  }
  func.func @transform_3(%arg0: i32) -> (i32, i32) {
    %c0_i32 = arith.constant 0 : i32
    %c0_i32_0 = arith.constant 0 : i32
    %c0_i32_1 = arith.constant 0 : i32
    return %c0_i32, %c0_i32_0 : i32, i32
  }
  func.func @transform_4(%arg0: i32) -> (i32, i32) {
    %c0_i32 = arith.constant 0 : i32
    %c0_i32_0 = arith.constant 0 : i32
    %c0_i32_1 = arith.constant 0 : i32
    return %c0_i32, %c0_i32_0 : i32, i32
  }
  func.func @transform_5(%arg0: i32) -> (i32, i32) {
    %c0_i32 = arith.constant 0 : i32
    %c0_i32_0 = arith.constant 0 : i32
    %c0_i32_1 = arith.constant 0 : i32
    return %c0_i32, %c0_i32_0 : i32, i32
  }
  func.func @transform_6(%arg0: i32) -> (i32, i32) {
    %c0_i32 = arith.constant 0 : i32
    %c0_i32_0 = arith.constant 0 : i32
    %c0_i32_1 = arith.constant 0 : i32
    return %c0_i32, %c0_i32_0 : i32, i32
  }
  func.func @transform_7(%arg0: i32) -> (i32, i32) {
    %c0_i32 = arith.constant 0 : i32
    %c0_i32_0 = arith.constant 0 : i32
    return %arg0, %c0_i32 : i32, i32
  }
}

</mosaic_0001>

<llo_original>
// kernel: imitation_model_forward.1
$region0: #{imitation_model_forward.1}
  #allocation0 [shape = 'u32[]', space=smem, size = 0x4, offset = 0x4, fixed_abs, tag = 'smem constant byte address 0x4 - core index']
  #allocation1 [shape = 'u32[72,128]{1,0:T(1,128)}', space=vmem, size = 0x9000, scoped, tag = 'internal scratch']
  %s0 = inlined_call_operand.vmem [shape: bf16[8,64], index: 0, kind: input, shape index: {}]
  %s1 = inlined_call_operand.vmem [shape: bf16[64,128], index: 1, kind: input, shape index: {}]
  %s2 = inlined_call_operand.vmem [shape: f32[1,128], index: 2, kind: input, shape index: {}]
  %s3 = inlined_call_operand.vmem [shape: bf16[128,128], index: 3, kind: input, shape index: {}]
  %s4 = inlined_call_operand.vmem [shape: f32[1,128], index: 4, kind: input, shape index: {}]
  %s5 = inlined_call_operand.vmem [shape: bf16[128,128], index: 5, kind: input, shape index: {}]
  %s6 = inlined_call_operand.vmem [shape: f32[1,128], index: 6, kind: input, shape index: {}]
  %s7 = inlined_call_operand.hbm [shape: f32[8,128], index: 7, kind: output, shape index: {}]
  %s8 = sld [smem:[#allocation0]]
  $region38: #{imitation_model_forward.1} parent=0
    _
  %s10 = ssub.s32 1, %s8
  %s11 = scalar_select 0, %s10, %s8
  $region1: #{imitation_model_forward.1} parent=0
    #allocation2 [shape = 'u8[4096]{0}', space=vmem, size = 0x1000, scoped, tag = 'output window, operand 0, single buffered']
    #allocation3 [shape = 's32[1]{0}', space=sflag, size = 0x4, scoped, tag = 'scoped memory for imitation_model_forward.1']
    %12 = vsyncpa [#allocation3], 0
    // Predicated region
    $region2: #{imitation_model_forward.1} parent=1 // pred_check
      _
    $region3: #{imitation_model_forward.1} parent=1 // pred_check_branch
      %14 = sbr.rel (0) target = $region5
    $region4: #{imitation_model_forward.1} parent=1 // pred_region
      _
    $region5: #{imitation_model_forward.1} parent=1 // pred_fallthru
      _
    // Predicated region
    $region6: #{imitation_model_forward.1} parent=1 // pred_check
      _
    $region7: #{imitation_model_forward.1} parent=1 // pred_check_branch
      %16 = sbr.rel (0) target = $region9
    $region8: #{imitation_model_forward.1} parent=1 // pred_region
      _
    $region9: #{imitation_model_forward.1} parent=1 // pred_fallthru
      _
    // Predicated region
    $region10: #{imitation_model_forward.1} parent=1 // pred_check
      _
    $region11: #{imitation_model_forward.1} parent=1 // pred_check_branch
      %18 = sbr.rel (0) target = $region13
    $region12: #{imitation_model_forward.1} parent=1 // pred_region
      _
    $region13: #{imitation_model_forward.1} parent=1 // pred_fallthru
      _
    // Predicated region
    $region14: #{imitation_model_forward.1} parent=1 // pred_check
      _
    $region15: #{imitation_model_forward.1} parent=1 // pred_check_branch
      %20 = sbr.rel (0) target = $region17
    $region16: #{imitation_model_forward.1} parent=1 // pred_region
      _
    $region17: #{imitation_model_forward.1} parent=1 // pred_fallthru
      _
    // Predicated region
    $region18: #{imitation_model_forward.1} parent=1 // pred_check
      _
    $region19: #{imitation_model_forward.1} parent=1 // pred_check_branch
      %22 = sbr.rel (0) target = $region21
    $region20: #{imitation_model_forward.1} parent=1 // pred_region
      _
    $region21: #{imitation_model_forward.1} parent=1 // pred_fallthru
      _
    // Predicated region
    $region22: #{imitation_model_forward.1} parent=1 // pred_check
      _
    $region23: #{imitation_model_forward.1} parent=1 // pred_check_branch
      %24 = sbr.rel (0) target = $region25
    $region24: #{imitation_model_forward.1} parent=1 // pred_region
      _
    $region25: #{imitation_model_forward.1} parent=1 // pred_fallthru
      _
    // Predicated region
    $region26: #{imitation_model_forward.1} parent=1 // pred_check
      _
    $region27: #{imitation_model_forward.1} parent=1 // pred_check_branch
      %26 = sbr.rel (0) target = $region29
    $region28: #{imitation_model_forward.1} parent=1 // pred_region
      _
    $region29: #{imitation_model_forward.1} parent=1 // pred_fallthru
      _
    %v28 = vld [vmem:[%s0] sm:$0xf]
    %v29 = vld [vmem:[%s1] sm:$0xf]
    %v30 = vld [vmem:[%s1 + $0x4] sm:$0xf]
    %v31 = vld [vmem:[%s1 + $0x8] sm:$0xf]
    %v32 = vld [vmem:[%s1 + $0xc] sm:$0xf]
    %v33 = vld [vmem:[%s1 + $0x10] sm:$0xf]
    %v34 = vld [vmem:[%s1 + $0x14] sm:$0xf]
    %v35 = vld [vmem:[%s1 + $0x18] sm:$0xf]
    %v36 = vld [vmem:[%s1 + $0x1c] sm:$0xf]
    %v37 = vld [vmem:[%s2] sm:$0x1]
    %v39 = vperm.slane %v37, 0
    %v49 = vunpack.c.l.b16 %v29
    %v50 = vunpack.c.l.b16 %v30
    %v51 = vunpack.c.l.b16 %v31
    %v52 = vunpack.c.l.b16 %v32
    %v53 = vunpack.c.l.b16 %v33
    %v54 = vunpack.c.l.b16 %v34
    %v55 = vunpack.c.l.b16 %v35
    %v56 = vunpack.c.l.b16 %v36
    %v57 = vpack.c.b16 %v50, %v49
    %v58 = vpack.c.b16 %v52, %v51
    %v59 = vpack.c.b16 %v54, %v53
    %v60 = vpack.c.b16 %v56, %v55
    %vm65 = vcmask 523264
    %v67 = vsel %vm65, %v28, 0
    %69 = vmatpush.bf16.msra.mxu0 0
    %70 = vmatpush.bf16.msra.mxu0 0
    %71 = vmatpush.bf16.msra.mxu0 0
    %72 = vmatpush.bf16.msra.mxu0 0
    %73 = vmatpush.bf16.msra.mxu0 %v60
    %74 = vmatpush.bf16.msra.mxu0 %v59
    %75 = vmatpush.bf16.msra.mxu0 %v58
    %76 = vmatpush.bf16.msra.mxu0 %v57
    %77 = vmatmul.bf16.gmra.mxu0 %v67
    %v78 = vpop.f32.mrf.mxu0
    %v79 = vadd.f32 %v39, %v78
    %v80 = vpop.f32.mrf.mxu0
    %81 = vdwg.mxu0
    %v82 = vmax.f32 %v79, 0.0
    %v83 = vpack.c.bf16 %v82, %v82
    %v84 = vld [vmem:[%s3] sm:$0xf]
    %v85 = vld [vmem:[%s3 + $0x4] sm:$0xf]
    %v86 = vld [vmem:[%s3 + $0x8] sm:$0xf]
    %v87 = vld [vmem:[%s3 + $0xc] sm:$0xf]
    %v88 = vld [vmem:[%s3 + $0x10] sm:$0xf]
    %v89 = vld [vmem:[%s3 + $0x14] sm:$0xf]
    %v90 = vld [vmem:[%s3 + $0x18] sm:$0xf]
    %v91 = vld [vmem:[%s3 + $0x1c] sm:$0xf]
    %v92 = vld [vmem:[%s3 + $0x20] sm:$0xf]
    %v93 = vld [vmem:[%s3 + $0x24] sm:$0xf]
    %v94 = vld [vmem:[%s3 + $0x28] sm:$0xf]
    %v95 = vld [vmem:[%s3 + $0x2c] sm:$0xf]
    %v96 = vld [vmem:[%s3 + $0x30] sm:$0xf]
    %v97 = vld [vmem:[%s3 + $0x34] sm:$0xf]
    %v98 = vld [vmem:[%s3 + $0x38] sm:$0xf]
    %v99 = vld [vmem:[%s3 + $0x3c] sm:$0xf]
    %v100 = vld [vmem:[%s4] sm:$0x1]
    %v102 = vperm.slane %v100, 0
    %v120 = vunpack.c.l.b16 %v84
    %v121 = vunpack.c.l.b16 %v85
    %v122 = vunpack.c.l.b16 %v86
    %v123 = vunpack.c.l.b16 %v87
    %v124 = vunpack.c.l.b16 %v88
    %v125 = vunpack.c.l.b16 %v89
    %v126 = vunpack.c.l.b16 %v90
    %v127 = vunpack.c.l.b16 %v91
    %v128 = vunpack.c.l.b16 %v92
    %v129 = vunpack.c.l.b16 %v93
    %v130 = vunpack.c.l.b16 %v94
    %v131 = vunpack.c.l.b16 %v95
    %v132 = vunpack.c.l.b16 %v96
    %v133 = vunpack.c.l.b16 %v97
    %v134 = vunpack.c.l.b16 %v98
    %v135 = vunpack.c.l.b16 %v99
    %v136 = vpack.c.b16 %v121, %v120
    %v137 = vpack.c.b16 %v123, %v122
    %v138 = vpack.c.b16 %v125, %v124
    %v139 = vpack.c.b16 %v127, %v126
    %v140 = vpack.c.b16 %v129, %v128
    %v141 = vpack.c.b16 %v131, %v130
    %v142 = vpack.c.b16 %v133, %v132
    %v143 = vpack.c.b16 %v135, %v134
    %152 = vmatpush.bf16.msra.mxu0 %v143
    %153 = vmatpush.bf16.msra.mxu0 %v142
    %154 = vmatpush.bf16.msra.mxu0 %v141
    %155 = vmatpush.bf16.msra.mxu0 %v140
    %156 = vmatpush.bf16.msra.mxu0 %v139
    %157 = vmatpush.bf16.msra.mxu0 %v138
    %158 = vmatpush.bf16.msra.mxu0 %v137
    %159 = vmatpush.bf16.msra.mxu0 %v136
    %160 = vmatmul.bf16.gmra.mxu0 %v83
    %v161 = vpop.f32.mrf.mxu0
    %v162 = vadd.f32 %v102, %v161
    %v163 = vpop.f32.mrf.mxu0
    %164 = vdwg.mxu0
    %v165 = vmax.f32 %v162, 0.0
    %v166 = vpack.c.bf16 %v165, %v165
    %v167 = vld [vmem:[%s5] sm:$0xf]
    %v168 = vld [vmem:[%s5 + $0x4] sm:$0xf]
    %v169 = vld [vmem:[%s5 + $0x8] sm:$0xf]
    %v170 = vld [vmem:[%s5 + $0xc] sm:$0xf]
    %v171 = vld [vmem:[%s5 + $0x10] sm:$0xf]
    %v172 = vld [vmem:[%s5 + $0x14] sm:$0xf]
    %v173 = vld [vmem:[%s5 + $0x18] sm:$0xf]
    %v174 = vld [vmem:[%s5 + $0x1c] sm:$0xf]
    %v175 = vld [vmem:[%s5 + $0x20] sm:$0xf]
    %v176 = vld [vmem:[%s5 + $0x24] sm:$0xf]
    %v177 = vld [vmem:[%s5 + $0x28] sm:$0xf]
    %v178 = vld [vmem:[%s5 + $0x2c] sm:$0xf]
    %v179 = vld [vmem:[%s5 + $0x30] sm:$0xf]
    %v180 = vld [vmem:[%s5 + $0x34] sm:$0xf]
    %v181 = vld [vmem:[%s5 + $0x38] sm:$0xf]
    %v182 = vld [vmem:[%s5 + $0x3c] sm:$0xf]
    %v183 = vld [vmem:[%s6] sm:$0x1]
    %v185 = vperm.slane %v183, 0
    %v203 = vunpack.c.l.b16 %v167
    %v204 = vunpack.c.l.b16 %v168
    %v205 = vunpack.c.l.b16 %v169
    %v206 = vunpack.c.l.b16 %v170
    %v207 = vunpack.c.l.b16 %v171
    %v208 = vunpack.c.l.b16 %v172
    %v209 = vunpack.c.l.b16 %v173
    %v210 = vunpack.c.l.b16 %v174
    %v211 = vunpack.c.l.b16 %v175
    %v212 = vunpack.c.l.b16 %v176
    %v213 = vunpack.c.l.b16 %v177
    %v214 = vunpack.c.l.b16 %v178
    %v215 = vunpack.c.l.b16 %v179
    %v216 = vunpack.c.l.b16 %v180
    %v217 = vunpack.c.l.b16 %v181
    %v218 = vunpack.c.l.b16 %v182
    %v219 = vpack.c.b16 %v204, %v203
    %v220 = vpack.c.b16 %v206, %v205
    %v221 = vpack.c.b16 %v208, %v207
    %v222 = vpack.c.b16 %v210, %v209
    %v223 = vpack.c.b16 %v212, %v211
    %v224 = vpack.c.b16 %v214, %v213
    %v225 = vpack.c.b16 %v216, %v215
    %v226 = vpack.c.b16 %v218, %v217
    %235 = vmatpush.bf16.msra.mxu0 %v226
    %236 = vmatpush.bf16.msra.mxu0 %v225
    %237 = vmatpush.bf16.msra.mxu0 %v224
    %238 = vmatpush.bf16.msra.mxu0 %v223
    %239 = vmatpush.bf16.msra.mxu0 %v222
    %240 = vmatpush.bf16.msra.mxu0 %v221
    %241 = vmatpush.bf16.msra.mxu0 %v220
    %242 = vmatpush.bf16.msra.mxu0 %v219
    %243 = vmatmul.bf16.gmra.mxu0 %v166
    %v244 = vpop.f32.mrf.mxu0
    %v245 = vadd.f32 %v185, %v244
    %v246 = vpop.f32.mrf.mxu0
    %247 = vdwg.mxu0
    %248 = vst [vmem:[#allocation2] sm:$0xff] %v245
    // Predicated region
    $region30: #{imitation_model_forward.1} parent=1 // pred_check
      _
    $region31: #{imitation_model_forward.1} parent=1 // pred_check_branch
      %250 = sbr.rel (0) target = $region33
    $region32: #{imitation_model_forward.1} parent=1 // pred_region
      %252 = vsyncadd [#allocation3], 0
      %s254 = sshll.u32 [#allocation2], 4
      %s255 = int_to_ptr.vmem [resolvable:$true] %s254
      %s256 = sshll.u32 %s7, 4
      %s257 = int_to_ptr.hbm [resolvable:$true] %s256
      %259 = dma.vmem_to_hbm [thread:$0]  %s255, 128, %s257, [#allocation3]
    $region33: #{imitation_model_forward.1} parent=1 // pred_fallthru
      _
    // Predicated region
    $region34: #{imitation_model_forward.1} parent=1 // pred_check
      _
    $region35: #{imitation_model_forward.1} parent=1 // pred_check_branch
      %261 = sbr.rel (0) target = $region37
    $region36: #{imitation_model_forward.1} parent=1 // pred_region
      %263 = dma.done [#allocation3], 128
    $region37: #{imitation_model_forward.1} parent=1 // pred_fallthru
      _
    %264 = vsyncpa [#allocation3], 1

</llo_original>
